<compile_context>
chip_gen: v5e
topology: v5e:2x2
jax: 0.10.0
libtpu: 0.0.40
codegen_flags: <defaults>
</compile_context>

<pallas_src>
import jax
import jax.numpy as jnp
from jax.experimental import pallas as pl
from jax.experimental.pallas import tpu as pltpu


def _global_attention_kernel(x_ref, ctx_ref, w_in_ref, w_out_c_ref, w_out_x_ref,
                             out_ref, attn_ref):
    # x:       (TB, D)    native dtype (MXU operand)
    # ctx:     (TB, S, D) native dtype
    # w_in:    (D, D)  == linear_in.weight^T
    # w_out_c: (D, D)  == linear_out.weight^T rows [0:D)   (applied to wctx)
    # w_out_x: (D, D)  == linear_out.weight^T rows [D:2D)  (applied to input)
    x = x_ref[...]
    ctx = ctx_ref[...]
    w_in = w_in_ref[...]
    w_out_c = w_out_c_ref[...]
    w_out_x = w_out_x_ref[...]

    # linear_in on the MXU, f32 accumulation (no operand upcast).
    target = jnp.dot(x, w_in, preferred_element_type=jnp.float32)    # (TB, D) f32

    # scores / wctx are batched mat-vecs -> keep them off the MXU and compute
    # them on the VPU as broadcast-multiply + reduce, accumulating in f32.
    ctx_f32 = ctx.astype(jnp.float32)
    scores = jnp.sum(ctx_f32 * target[:, None, :], axis=-1)          # (TB, S) f32

    # softmax over source length S (f32 math; exp on EUP, approx recip on EUP).
    m = jnp.max(scores, axis=-1, keepdims=True)
    e = jnp.exp(scores - m)
    attn = e * pl.reciprocal(jnp.sum(e, axis=-1, keepdims=True), approx=True)

    # weighted context: sum over S on the VPU/XLU.                  -> (TB, D)
    wctx = jnp.sum(attn[:, :, None] * ctx_f32, axis=1)

    # linear_out(concat([wctx, x])) == wctx @ Wc + x @ Wx, MXU with f32 acc,
    # then tanh in f32.
    out = jnp.tanh(
        jnp.dot(wctx.astype(w_out_c.dtype), w_out_c,
                preferred_element_type=jnp.float32)
        + jnp.dot(x, w_out_x, preferred_element_type=jnp.float32))

    out_ref[...] = out.astype(out_ref.dtype)
    attn_ref[...] = attn.astype(attn_ref.dtype)


def prepare_global_attention_weights(w_in, w_out):
    """Call ONCE at parameter-init time (torch layout in, kernel layout out).

    w_in:  (D, D)   linear_in.weight
    w_out: (D, 2D)  linear_out.weight
    Returns (w_in_t, w_out_c, w_out_x), each (D, D), so every in-kernel matmul
    is row-major `x @ W` with the contraction on the lane (last) dim.
    """
    D = w_in.shape[0]
    w_in_t = w_in.T                  # (D, D)
    w_out_t = w_out.T                # (2D, D)
    w_out_c = w_out_t[:D, :]         # applied to weightedContext
    w_out_x = w_out_t[D:, :]         # applied to input
    return w_in_t, w_out_c, w_out_x


def _choose_tile_b(B, S, D, itemsize, ctx_budget_bytes=24 << 20):
    """Largest batch tile that divides B, keeps the sublane dim 8-aligned
    (or equals B), and whose double-buffered ctx block (counted at f32 width
    to cover in-kernel upcast temporaries) fits a v7x-safe VMEM budget."""
    per_row = 2 * S * D * max(itemsize, 4)     # double-buffered ctx bytes / batch row
    if B % 8 != 0:
        return B                               # full-array block along batch
    best = 8
    for tb in range(8, min(B, 512) + 1, 8):
        if B % tb == 0 and tb * per_row <= ctx_budget_bytes:
            best = tb
    return best


def _global_attention_impl(x, ctx, w_in_t, w_out_c, w_out_x):
    B, D = x.shape
    _, S, _ = ctx.shape

    tile_b = _choose_tile_b(B, S, D, x.dtype.itemsize)
    grid = (B // tile_b,)

    # VMEM budget: double-buffered streaming blocks (sized at f32 width for
    # compute temporaries) + resident weights + slack; capped for v7x (64 MiB).
    blk_bytes = tile_b * (S * D + 2 * D + S) * 4
    w_bytes = 3 * D * D * w_in_t.dtype.itemsize
    vmem_limit = int(min(64 << 20, max(32 << 20, 3 * blk_bytes + w_bytes + (4 << 20))))

    itemsize = x.dtype.itemsize
    cost = pl.CostEstimate(
        flops=6 * B * D * D + 4 * B * S * D,
        transcendentals=B * S + B * D + B,
        bytes_accessed=itemsize * (B * D            # x
                                   + B * S * D      # ctx
                                   + 3 * D * D      # weights
                                   + B * D          # out
                                   + B * S),        # attn
    )

    out, attn = pl.pallas_call(
        _global_attention_kernel,
        out_shape=(jax.ShapeDtypeStruct((B, D), x.dtype),
                   jax.ShapeDtypeStruct((B, S), x.dtype)),
        grid=grid,
        in_specs=[
            pl.BlockSpec((tile_b, D), lambda i: (i, 0)),        # x      (streamed)
            pl.BlockSpec((tile_b, S, D), lambda i: (i, 0, 0)),  # ctx    (streamed)
            pl.BlockSpec((D, D), lambda i: (0, 0)),             # w_in   (resident)
            pl.BlockSpec((D, D), lambda i: (0, 0)),             # w_out_c(resident)
            pl.BlockSpec((D, D), lambda i: (0, 0)),             # w_out_x(resident)
        ],
        out_specs=(
            pl.BlockSpec((tile_b, D), lambda i: (i, 0)),        # out
            pl.BlockSpec((tile_b, S), lambda i: (i, 0)),        # attn
        ),
        compiler_params=pltpu.CompilerParams(
            dimension_semantics=("parallel",),   # megacore sharding on v7x
            vmem_limit_bytes=vmem_limit,
        ),
        cost_estimate=cost,
    )(x, ctx, w_in_t, w_out_c, w_out_x)
    return out, attn


global_attention = jax.jit(_global_attention_impl)


def _reference(x, ctx, w_in, w_out):
    target = x @ w_in.T
    scores = jnp.einsum('bsd,bd->bs', ctx, target)
    attn = jax.nn.softmax(scores, axis=-1)
    wctx = jnp.einsum('bs,bsd->bd', attn, ctx)
    combined = jnp.concatenate([wctx, x], axis=1)
    out = jnp.tanh(combined @ w_out.T)
    return out, attn


if __name__ == "__main__":
    B, S, D = 2, 8, 32
    key = jax.random.PRNGKey(0)
    k1, k2, k3, k4 = jax.random.split(key, 4)

    x = jax.random.normal(k1, (B, D), dtype=jnp.float32)
    ctx = jax.random.normal(k2, (B, S, D), dtype=jnp.float32)
    # Deterministic parameter init (PyTorch nn.Linear-like uniform scale).
    bound_in = 1.0 / (D ** 0.5)
    bound_out = 1.0 / ((2 * D) ** 0.5)
    w_in = jax.random.uniform(k3, (D, D), jnp.float32, -bound_in, bound_in)          # linear_in.weight
    w_out = jax.random.uniform(k4, (D, 2 * D), jnp.float32, -bound_out, bound_out)   # linear_out.weight

    # Weight layout prep happens once (parameter-init time), not per call.
    w_in_t, w_out_c, w_out_x = prepare_global_attention_weights(w_in, w_out)

    out, attn = global_attention(x, ctx, w_in_t, w_out_c, w_out_x)
    jax.block_until_ready((out, attn))

    ref_out, ref_attn = _reference(x, ctx, w_in, w_out)
    # Tolerances account for the EUP approx reciprocal (~2^-12 relative) in the
    # softmax denominator.
    assert jnp.allclose(out, ref_out, atol=2e-3, rtol=2e-3), "output mismatch"
    assert jnp.allclose(attn, ref_attn, atol=2e-3, rtol=2e-3), "attn mismatch"
    assert jnp.allclose(jnp.sum(attn, axis=-1), 1.0, atol=2e-3), "attn not normalized"

    print("KERNEL_OK")
</pallas_src>

<mosaic_0001>
module attributes {stable_mosaic.version = 11 : i64} {
  func.func @_global_attention_kernel(%arg0: i32, %arg1: memref<2x32xf32, #tpu.memory_space<vmem>>, %arg2: memref<2x8x32xf32, #tpu.memory_space<vmem>>, %arg3: memref<32x32xf32, #tpu.memory_space<vmem>>, %arg4: memref<32x32xf32, #tpu.memory_space<vmem>>, %arg5: memref<32x32xf32, #tpu.memory_space<vmem>>, %arg6: memref<2x32xf32, #tpu.memory_space<vmem>>, %arg7: memref<2x8xf32, #tpu.memory_space<vmem>>) attributes {dimension_semantics = [#tpu.dimension_semantics<parallel>], iteration_bounds = array<i64: 1>, scalar_prefetch = 0 : i64, scratch_operands = 0 : i64, tpu.core_type = #tpu.core_type<tc>, window_params = [{transform_indices = @transform_0, window_bounds = array<i64: 2, 32>}, {transform_indices = @transform_1, window_bounds = array<i64: 2, 8, 32>}, {pipeline_mode = #tpu.pipeline_mode<synchronous>, transform_indices = @transform_2, window_bounds = array<i64: 32, 32>}, {pipeline_mode = #tpu.pipeline_mode<synchronous>, transform_indices = @transform_3, window_bounds = array<i64: 32, 32>}, {pipeline_mode = #tpu.pipeline_mode<synchronous>, transform_indices = @transform_4, window_bounds = array<i64: 32, 32>}, {transform_indices = @transform_5, window_bounds = array<i64: 2, 32>}, {transform_indices = @transform_6, window_bounds = array<i64: 2, 8>}]} {
    %c0 = arith.constant 0 : index
    %c0_0 = arith.constant 0 : index
    %0 = vector.load %arg1[%c0, %c0_0] : memref<2x32xf32, #tpu.memory_space<vmem>>, vector<2x32xf32>
    %c0_1 = arith.constant 0 : index
    %c0_2 = arith.constant 0 : index
    %c0_3 = arith.constant 0 : index
    %1 = vector.load %arg2[%c0_1, %c0_2, %c0_3] : memref<2x8x32xf32, #tpu.memory_space<vmem>>, vector<2x8x32xf32>
    %c0_4 = arith.constant 0 : index
    %c0_5 = arith.constant 0 : index
    %2 = vector.load %arg3[%c0_4, %c0_5] : memref<32x32xf32, #tpu.memory_space<vmem>>, vector<32x32xf32>
    %c0_6 = arith.constant 0 : index
    %c0_7 = arith.constant 0 : index
    %3 = vector.load %arg4[%c0_6, %c0_7] : memref<32x32xf32, #tpu.memory_space<vmem>>, vector<32x32xf32>
    %c0_8 = arith.constant 0 : index
    %c0_9 = arith.constant 0 : index
    %4 = vector.load %arg5[%c0_8, %c0_9] : memref<32x32xf32, #tpu.memory_space<vmem>>, vector<32x32xf32>
    %cst = arith.constant dense<0.000000e+00> : vector<2x32xf32>
    %5 = tpu.matmul %0, %2, %cst {dimension_numbers = #tpu.dot_dimension_numbers<[1], [0], [0], [1], [0, 0, 1, 1], [], []>} : vector<2x32xf32>, vector<32x32xf32>, vector<2x32xf32> -> vector<2x32xf32>
    %6 = vector.shape_cast %5 : vector<2x32xf32> to vector<2x1x32xf32>
    %7 = vector.broadcast %6 : vector<2x1x32xf32> to vector<2x8x32xf32>
    %8 = arith.mulf %1, %7 : vector<2x8x32xf32>
    %cst_10 = arith.constant dense<0.000000e+00> : vector<2x8xf32>
    %9 = vector.multi_reduction <add>, %8, %cst_10 [2] : vector<2x8x32xf32> to vector<2x8xf32>
    %cst_11 = arith.constant dense<0xFF800000> : vector<2xf32>
    %10 = vector.multi_reduction <maximumf>, %9, %cst_11 [1] : vector<2x8xf32> to vector<2xf32>
    %11 = vector.shape_cast %10 : vector<2xf32> to vector<2x1xf32>
    %12 = vector.broadcast %11 : vector<2x1xf32> to vector<2x8xf32>
    %13 = arith.subf %9, %12 : vector<2x8xf32>
    %14 = math.exp %13 : vector<2x8xf32>
    %cst_12 = arith.constant dense<0.000000e+00> : vector<2xf32>
    %15 = vector.multi_reduction <add>, %14, %cst_12 [1] : vector<2x8xf32> to vector<2xf32>
    %16 = vector.shape_cast %15 : vector<2xf32> to vector<2x1xf32>
    %17 = tpu.reciprocal %16 {approx = true} : vector<2x1xf32> -> vector<2x1xf32>
    %18 = vector.broadcast %17 : vector<2x1xf32> to vector<2x8xf32>
    %19 = arith.mulf %14, %18 : vector<2x8xf32>
    %20 = vector.shape_cast %19 : vector<2x8xf32> to vector<2x8x1xf32>
    %21 = vector.broadcast %20 : vector<2x8x1xf32> to vector<2x8x32xf32>
    %22 = arith.mulf %21, %1 : vector<2x8x32xf32>
    %cst_13 = arith.constant dense<0.000000e+00> : vector<2x32xf32>
    %23 = vector.multi_reduction <add>, %22, %cst_13 [1] : vector<2x8x32xf32> to vector<2x32xf32>
    %cst_14 = arith.constant dense<0.000000e+00> : vector<2x32xf32>
    %24 = tpu.matmul %23, %3, %cst_14 {dimension_numbers = #tpu.dot_dimension_numbers<[1], [0], [0], [1], [0, 0, 1, 1], [], []>} : vector<2x32xf32>, vector<32x32xf32>, vector<2x32xf32> -> vector<2x32xf32>
    %cst_15 = arith.constant dense<0.000000e+00> : vector<2x32xf32>
    %25 = tpu.matmul %0, %4, %cst_15 {dimension_numbers = #tpu.dot_dimension_numbers<[1], [0], [0], [1], [0, 0, 1, 1], [], []>} : vector<2x32xf32>, vector<32x32xf32>, vector<2x32xf32> -> vector<2x32xf32>
    %26 = arith.addf %24, %25 : vector<2x32xf32>
    %27 = math.tanh %26 : vector<2x32xf32>
    %c0_16 = arith.constant 0 : index
    %c0_17 = arith.constant 0 : index
    %28 = vector.load %arg6[%c0_16, %c0_17] : memref<2x32xf32, #tpu.memory_space<vmem>>, vector<2x32xf32>
    tpu.vector_store %arg6[%c0_16, %c0_17], %27 {strides = array<i32>} : memref<2x32xf32, #tpu.memory_space<vmem>>, vector<2x32xf32>,
    %c0_18 = arith.constant 0 : index
    %c0_19 = arith.constant 0 : index
    %29 = vector.load %arg7[%c0_18, %c0_19] : memref<2x8xf32, #tpu.memory_space<vmem>>, vector<2x8xf32>
    tpu.vector_store %arg7[%c0_18, %c0_19], %19 {strides = array<i32>} : memref<2x8xf32, #tpu.memory_space<vmem>>, vector<2x8xf32>,
    return
  }
  func.func @transform_0(%arg0: i32) -> (i32, i32) {
    %c0_i32 = arith.constant 0 : i32
    %c0_i32_0 = arith.constant 0 : i32
    return %arg0, %c0_i32 : i32, i32
  }
  func.func @transform_1(%arg0: i32) -> (i32, i32, i32) {
    %c0_i32 = arith.constant 0 : i32
    %c0_i32_0 = arith.constant 0 : i32
    %c0_i32_1 = arith.constant 0 : i32
    return %arg0, %c0_i32, %c0_i32_0 : i32, i32, i32
  }
  func.func @transform_2(%arg0: i32) -> (i32, i32) {
    %c0_i32 = arith.constant 0 : i32
    %c0_i32_0 = arith.constant 0 : i32
    %c0_i32_1 = arith.constant 0 : i32
    return %c0_i32, %c0_i32_0 : i32, i32
  }
  func.func @transform_3(%arg0: i32) -> (i32, i32) {
    %c0_i32 = arith.constant 0 : i32
    %c0_i32_0 = arith.constant 0 : i32
    %c0_i32_1 = arith.constant 0 : i32
    return %c0_i32, %c0_i32_0 : i32, i32
  }
  func.func @transform_4(%arg0: i32) -> (i32, i32) {
    %c0_i32 = arith.constant 0 : i32
    %c0_i32_0 = arith.constant 0 : i32
    %c0_i32_1 = arith.constant 0 : i32
    return %c0_i32, %c0_i32_0 : i32, i32
  }
  func.func @transform_5(%arg0: i32) -> (i32, i32) {
    %c0_i32 = arith.constant 0 : i32
    %c0_i32_0 = arith.constant 0 : i32
    return %arg0, %c0_i32 : i32, i32
  }
  func.func @transform_6(%arg0: i32) -> (i32, i32) {
    %c0_i32 = arith.constant 0 : i32
    %c0_i32_0 = arith.constant 0 : i32
    return %arg0, %c0_i32 : i32, i32
  }
}

</mosaic_0001>

<llo_original>
// kernel: _global_attention_impl.1
$region0: #{_global_attention_impl.1}
  #allocation0 [shape = 'u32[]', space=smem, size = 0x4, offset = 0x4, fixed_abs, tag = 'smem constant byte address 0x4 - core index']
  #allocation1 [shape = 'u32[72,128]{1,0:T(1,128)}', space=vmem, size = 0x9000, scoped, tag = 'internal scratch']
  %s0 = inlined_call_operand.hbm [shape: f32[2,32], index: 0, kind: input, shape index: {}]
  %s1 = inlined_call_operand.hbm [shape: f32[2,8,32], index: 1, kind: input, shape index: {}]
  %s2 = inlined_call_operand.hbm [shape: f32[32,32], index: 2, kind: input, shape index: {}]
  %s3 = inlined_call_operand.hbm [shape: f32[32,32], index: 3, kind: input, shape index: {}]
  %s4 = inlined_call_operand.hbm [shape: f32[32,32], index: 4, kind: input, shape index: {}]
  %s5 = inlined_call_operand.hbm [shape: f32[2,32], index: 5, kind: output, shape index: {0}]
  %s6 = inlined_call_operand.hbm [shape: f32[2,8], index: 6, kind: output, shape index: {1}]
  %7 = xla_tuple %s5, %s6
  %s8 = sld [smem:[#allocation0]]
  $region58: #{_global_attention_impl.1} parent=0
    _
  %s10 = ssub.s32 1, %s8
  %s11 = scalar_select 0, %s10, %s8
  $region1: #{_global_attention_impl.1} parent=0
    #allocation2 [shape = 'u8[1024]{0}', space=vmem, size = 0x400, scoped, tag = 'input window, operand 0, single buffered']
    #allocation3 [shape = 's32[1]{0}', space=sflag, size = 0x4, scoped, tag = 'scoped memory for _global_attention_impl.1']
    #allocation4 [shape = 's32[1]{0}', space=sflag, size = 0x4, scoped, tag = 'scoped memory for _global_attention_impl.1']
    #allocation5 [shape = 'u8[8192]{0}', space=vmem, size = 0x2000, scoped, tag = 'input window, operand 1, single buffered']
    #allocation6 [shape = 's32[1]{0}', space=sflag, size = 0x4, scoped, tag = 'scoped memory for _global_attention_impl.1']
    #allocation7 [shape = 'u8[16384]{0}', space=vmem, size = 0x4000, scoped, tag = 'input window, operand 2, single buffered']
    #allocation8 [shape = 'u8[16384]{0}', space=vmem, size = 0x4000, scoped, tag = 'input window, operand 3, single buffered']
    #allocation9 [shape = 's32[1]{0}', space=sflag, size = 0x4, scoped, tag = 'scoped memory for _global_attention_impl.1']
    #allocation10 [shape = 'u8[16384]{0}', space=vmem, size = 0x4000, scoped, tag = 'input window, operand 4, single buffered']
    #allocation11 [shape = 'u8[1024]{0}', space=vmem, size = 0x400, scoped, tag = 'output window, operand 0, single buffered']
    #allocation12 [shape = 'u8[1024]{0}', space=vmem, size = 0x400, scoped, tag = 'output window, operand 1, single buffered']
    #allocation13 [shape = 's32[1]{0}', space=sflag, size = 0x4, scoped, tag = 'scoped memory for _global_attention_impl.1']
    %12 = vsyncpa [#allocation3], 0
    %13 = vsyncpa [#allocation6], 0
    %14 = vsyncpa [#allocation9], 0
    %15 = vsyncpa [#allocation4], 0
    %16 = vsyncpa [#allocation13], 0
    // Predicated region
    $region2: #{_global_attention_impl.1} parent=1 // pred_check
      _
    $region3: #{_global_attention_impl.1} parent=1 // pred_check_branch
      %18 = sbr.rel (0) target = $region5
    $region4: #{_global_attention_impl.1} parent=1 // pred_region
      %20 = vsyncadd [#allocation3], 0
      %s22 = sshll.u32 %s0, 4
      %s23 = int_to_ptr.hbm [resolvable:$true] %s22
      %s24 = sshll.u32 [#allocation2], 4
      %s25 = int_to_ptr.vmem [resolvable:$true] %s24
      %27 = dma.hbm_to_vmem [thread:$0]  %s23, 32, %s25, [#allocation3]
    $region5: #{_global_attention_impl.1} parent=1 // pred_fallthru
      _
    // Predicated region
    $region6: #{_global_attention_impl.1} parent=1 // pred_check
      _
    $region7: #{_global_attention_impl.1} parent=1 // pred_check_branch
      %29 = sbr.rel (0) target = $region9
    $region8: #{_global_attention_impl.1} parent=1 // pred_region
      %31 = vsyncadd [#allocation6], 0
      %s32 = sshll.u32 %s1, 4
      %s33 = int_to_ptr.hbm [resolvable:$true] %s32
      %s34 = sshll.u32 [#allocation5], 4
      %s35 = int_to_ptr.vmem [resolvable:$true] %s34
      %40 = dma.hbm_to_vmem [thread:$0]  %s33, 256, %s35, [#allocation6], 128, 128, 8
    $region9: #{_global_attention_impl.1} parent=1 // pred_fallthru
      _
    // Predicated region
    $region10: #{_global_attention_impl.1} parent=1 // pred_check
      _
    $region11: #{_global_attention_impl.1} parent=1 // pred_check_branch
      %42 = sbr.rel (0) target = $region13
    $region12: #{_global_attention_impl.1} parent=1 // pred_region
      %44 = vsyncadd [#allocation6], 0
      %s45 = sshll.u32 %s2, 4
      %s46 = int_to_ptr.hbm [resolvable:$true] %s45
      %s47 = sshll.u32 [#allocation7], 4
      %s48 = int_to_ptr.vmem [resolvable:$true] %s47
      %53 = dma.hbm_to_vmem [thread:$0]  %s46, 512, %s48, [#allocation6], 128, 128, 8
    $region13: #{_global_attention_impl.1} parent=1 // pred_fallthru
      _
    // Predicated region
    $region14: #{_global_attention_impl.1} parent=1 // pred_check
      _
    $region15: #{_global_attention_impl.1} parent=1 // pred_check_branch
      %55 = sbr.rel (0) target = $region17
    $region16: #{_global_attention_impl.1} parent=1 // pred_region
      %57 = vsyncadd [#allocation9], 0
      %s58 = sshll.u32 %s3, 4
      %s59 = int_to_ptr.hbm [resolvable:$true] %s58
      %s60 = sshll.u32 [#allocation8], 4
      %s61 = int_to_ptr.vmem [resolvable:$true] %s60
      %66 = dma.hbm_to_vmem [thread:$0]  %s59, 512, %s61, [#allocation9], 128, 128, 8
    $region17: #{_global_attention_impl.1} parent=1 // pred_fallthru
      _
    // Predicated region
    $region18: #{_global_attention_impl.1} parent=1 // pred_check
      _
    $region19: #{_global_attention_impl.1} parent=1 // pred_check_branch
      %68 = sbr.rel (0) target = $region21
    $region20: #{_global_attention_impl.1} parent=1 // pred_region
      %70 = vsyncadd [#allocation9], 0
      %s71 = sshll.u32 %s4, 4
      %s72 = int_to_ptr.hbm [resolvable:$true] %s71
      %s73 = sshll.u32 [#allocation10], 4
      %s74 = int_to_ptr.vmem [resolvable:$true] %s73
      %79 = dma.hbm_to_vmem [thread:$0]  %s72, 512, %s74, [#allocation9], 128, 128, 8
    $region21: #{_global_attention_impl.1} parent=1 // pred_fallthru
      _
    // Predicated region
    $region22: #{_global_attention_impl.1} parent=1 // pred_check
      _
    $region23: #{_global_attention_impl.1} parent=1 // pred_check_branch
      %81 = sbr.rel (0) target = $region25
    $region24: #{_global_attention_impl.1} parent=1 // pred_region
      %83 = dma.done [#allocation3], 32
    $region25: #{_global_attention_impl.1} parent=1 // pred_fallthru
      _
    // Predicated region
    $region26: #{_global_attention_impl.1} parent=1 // pred_check
      _
    $region27: #{_global_attention_impl.1} parent=1 // pred_check_branch
      %85 = sbr.rel (0) target = $region29
    $region28: #{_global_attention_impl.1} parent=1 // pred_region
      %87 = dma.done [#allocation6], 256
    $region29: #{_global_attention_impl.1} parent=1 // pred_fallthru
      _
    // Predicated region
    $region30: #{_global_attention_impl.1} parent=1 // pred_check
      _
    $region31: #{_global_attention_impl.1} parent=1 // pred_check_branch
      %89 = sbr.rel (0) target = $region33
    $region32: #{_global_attention_impl.1} parent=1 // pred_region
      %91 = dma.done [#allocation6], 512
    $region33: #{_global_attention_impl.1} parent=1 // pred_fallthru
      _
    // Predicated region
    $region34: #{_global_attention_impl.1} parent=1 // pred_check
      _
    $region35: #{_global_attention_impl.1} parent=1 // pred_check_branch
      %93 = sbr.rel (0) target = $region37
    $region36: #{_global_attention_impl.1} parent=1 // pred_region
      %95 = dma.done [#allocation9], 512
    $region37: #{_global_attention_impl.1} parent=1 // pred_fallthru
      _
    // Predicated region
    $region38: #{_global_attention_impl.1} parent=1 // pred_check
      _
    $region39: #{_global_attention_impl.1} parent=1 // pred_check_branch
      %97 = sbr.rel (0) target = $region41
    $region40: #{_global_attention_impl.1} parent=1 // pred_region
      %99 = dma.done [#allocation9], 512
    $region41: #{_global_attention_impl.1} parent=1 // pred_fallthru
      _
    %v100 = vld [vmem:[#allocation2] sm:$0x3]
    %v101 = vld [vmem:[#allocation5] sm:$0xff]
    %v102 = vld [vmem:[#allocation5 + $0x8] sm:$0xff]
    %v103 = vld [vmem:[#allocation7] sm:$0xff]
    %v104 = vld [vmem:[#allocation7 + $0x8] sm:$0xff]
    %v105 = vld [vmem:[#allocation7 + $0x10] sm:$0xff]
    %v106 = vld [vmem:[#allocation7 + $0x18] sm:$0xff]
    %v107 = vld [vmem:[#allocation8] sm:$0xff]
    %v108 = vld [vmem:[#allocation8 + $0x8] sm:$0xff]
    %v109 = vld [vmem:[#allocation8 + $0x10] sm:$0xff]
    %v110 = vld [vmem:[#allocation8 + $0x18] sm:$0xff]
    %v111 = vld [vmem:[#allocation10] sm:$0xff]
    %v112 = vld [vmem:[#allocation10 + $0x8] sm:$0xff]
    %v113 = vld [vmem:[#allocation10 + $0x10] sm:$0xff]
    %v114 = vld [vmem:[#allocation10 + $0x18] sm:$0xff]
    %vm115 = vcmask 261120
    %v117 = vsel %vm115, %v100, 0
    %119 = vmatpush.msra.mxu0 0.0
    %120 = vmatpush.msra.mxu0 0.0
    %121 = vmatpush.msra.mxu0 0.0
    %122 = vmatpush.msra.mxu0 0.0
    %123 = vmatpush.msra.mxu0 0.0
    %124 = vmatpush.msra.mxu0 0.0
    %125 = vmatpush.msra.mxu0 0.0
    %126 = vmatpush.msra.mxu0 0.0
    %127 = vmatpush.msra.mxu0 0.0
    %128 = vmatpush.msra.mxu0 0.0
    %129 = vmatpush.msra.mxu0 0.0
    %130 = vmatpush.msra.mxu0 0.0
    %131 = vmatpush.msra.mxu0 %v106
    %132 = vmatpush.msra.mxu0 %v105
    %133 = vmatpush.msra.mxu0 %v104
    %134 = vmatpush.msra.mxu0 %v103
    %135 = vmatmul.f32.gmra.mxu0 %v117
    %v136 = vpop.f32.mrf.mxu0
    %v137 = vadd.f32 0.0, %v136
    %138 = vdwg.mxu0
    %v140 = vrot.slane %v137, 1
    %v141 = vperm.slane %v137, 0
    %v142 = vperm.slane %v140, 0
    %v145 = vmul.f32 %v101, %v141
    %v146 = vmul.f32 %v102, %v142
    %v147 = vsel %vm115, %v145, 0.0
    %148 = vadd.xlane.f32.xlu0 %v147
    %v149 = vpop.xlane.xlu0 %148
    %v150 = vsel %vm115, %v146, 0.0
    %151 = vadd.xlane.f32.xlu0 %v150
    %v152 = vpop.xlane.xlu0 %151
    %v155 = vlaneseq
    %v156 = vand.u32 %v155, 127
    %v157 = vperm.slane %v149, %v156
    %v158 = vperm.slane %v152, %v156
    %vm159 = vcmask 1041409
    %v160 = vsel %vm159, %v158, %v157
    %vm162 = vcmask 58368
    %v163 = vsel %vm162, %v160, -inf
    %164 = vmax.xlane.f32.xlu0 %v163
    %v165 = vpop.xlane.xlu0 %164
    %v167 = vperm.slane %v165, 0
    %v168 = vperm.slane %v165, 1
    %v171 = vsub.f32 %v149, %v167
    %v172 = vsub.f32 %v152, %v168
    %v173 = vmul.f32 %v171, 1.442695
    %v174 = vpow.pop %v173
    %v175 = vmul.f32 %v172, 1.442695
    %v176 = vpow.pop %v175
    %179 = vset.pattern.permute.xlu0 0
    %180 = vperm.xlu0 %179, %v174
    %v181 = vpop.permute.xlu0 %180
    %182 = vset.pattern.permute.xlu0 0
    %183 = vperm.xlu0 %182, %v176
    %v184 = vpop.permute.xlu0 %183
    %v185 = vperm.slane %v181, %v156
    %v186 = vperm.slane %v184, %v156
    %v187 = vsel %vm159, %v186, %v185
    %v189 = vsel %vm162, %v187, 0.0
    %190 = vadd.xlane.f32.xlu0 %v189
    %v191 = vpop.xlane.xlu0 %190
    %v192 = vrcp.pop %v191
    %v194 = vperm.slane %v192, 0
    %v195 = vperm.slane %v192, 1
    %v198 = vmul.f32 %v174, %v194
    %v199 = vmul.f32 %v176, %v195
    %201 = vset.pattern.permute.xlu0 0
    %202 = vperm.xlu0 %201, %v198
    %v203 = vpop.permute.xlu0 %202
    %206 = vset.pattern.permute.xlu0 0
    %207 = vperm.xlu0 %206, %v199
    %v208 = vpop.permute.xlu0 %207
    %v210 = vmul.f32 %v203, %v101
    %v211 = vmul.f32 %v208, %v102
    %v212 = vsel %vm115, %v210, 0.0
    %v213 = vrot.slane %v212, 4
    %v214 = vadd.f32 %v212, %v213
    %v215 = vrot.slane %v214, 2
    %v216 = vadd.f32 %v214, %v215
    %v217 = vrot.slane %v216, 1
    %v218 = vadd.f32 %v216, %v217
    %v219 = vsel %vm115, %v211, 0.0
    %v220 = vrot.slane %v219, 4
    %v221 = vadd.f32 %v219, %v220
    %v222 = vrot.slane %v221, 2
    %v223 = vadd.f32 %v221, %v222
    %v224 = vrot.slane %v223, 1
    %v225 = vadd.f32 %v223, %v224
    %226 = vmatpush.msra.mxu0 0.0
    %227 = vmatpush.msra.mxu0 0.0
    %228 = vmatpush.msra.mxu0 0.0
    %229 = vmatpush.msra.mxu0 0.0
    %230 = vmatpush.msra.mxu0 0.0
    %231 = vmatpush.msra.mxu0 0.0
    %232 = vmatpush.msra.mxu0 0.0
    %233 = vmatpush.msra.mxu0 0.0
    %234 = vmatpush.msra.mxu0 0.0
    %235 = vmatpush.msra.mxu0 0.0
    %236 = vmatpush.msra.mxu0 0.0
    %237 = vmatpush.msra.mxu0 0.0
    %238 = vmatpush.msra.mxu0 %v114
    %239 = vmatpush.msra.mxu0 %v113
    %240 = vmatpush.msra.mxu0 %v112
    %241 = vmatpush.msra.mxu0 %v111
    %242 = vmatmul.f32.gmra.mxu0 %v117
    %v243 = vpop.f32.mrf.mxu0
    %v244 = vadd.f32 0.0, %v243
    %245 = vdwg.mxu0
    %v248 = vsel %vm159, %v225, %v218
    %v249 = vsel %vm115, %v248, 0
    %251 = vmatpush.msra.mxu0 0.0
    %252 = vmatpush.msra.mxu0 0.0
    %253 = vmatpush.msra.mxu0 0.0
    %254 = vmatpush.msra.mxu0 0.0
    %255 = vmatpush.msra.mxu0 0.0
    %256 = vmatpush.msra.mxu0 0.0
    %257 = vmatpush.msra.mxu0 0.0
    %258 = vmatpush.msra.mxu0 0.0
    %259 = vmatpush.msra.mxu0 0.0
    %260 = vmatpush.msra.mxu0 0.0
    %261 = vmatpush.msra.mxu0 0.0
    %262 = vmatpush.msra.mxu0 0.0
    %263 = vmatpush.msra.mxu0 %v110
    %264 = vmatpush.msra.mxu0 %v109
    %265 = vmatpush.msra.mxu0 %v108
    %266 = vmatpush.msra.mxu0 %v107
    %267 = vmatmul.f32.gmra.mxu0 %v249
    %v268 = vpop.f32.mrf.mxu0
    %v269 = vadd.f32 %v244, %v268
    %270 = vdwg.mxu0
    %v271 = vtanh.pop %v269
    %vm272 = vcmask 254976
    %273 = vst.msk [vmem:[#allocation11] sm:$0x3] %vm272, %v271
    %v274 = vperm.slane %v203, %v156
    %v275 = vperm.slane %v208, %v156
    %v276 = vsel %vm159, %v275, %v274
    %278 = vst.msk [vmem:[#allocation12] sm:$0x3] %vm162, %v276
    // Predicated region
    $region42: #{_global_attention_impl.1} parent=1 // pred_check
      _
    $region43: #{_global_attention_impl.1} parent=1 // pred_check_branch
      %280 = sbr.rel (0) target = $region45
    $region44: #{_global_attention_impl.1} parent=1 // pred_region
      %282 = vsyncadd [#allocation4], 0
      %s284 = sshll.u32 [#allocation11], 4
      %s285 = int_to_ptr.vmem [resolvable:$true] %s284
      %s286 = sshll.u32 %s5, 4
      %s287 = int_to_ptr.hbm [resolvable:$true] %s286
      %289 = dma.vmem_to_hbm [thread:$0]  %s285, 32, %s287, [#allocation4]
    $region45: #{_global_attention_impl.1} parent=1 // pred_fallthru
      _
    // Predicated region
    $region46: #{_global_attention_impl.1} parent=1 // pred_check
      _
    $region47: #{_global_attention_impl.1} parent=1 // pred_check_branch
      %291 = sbr.rel (0) target = $region49
    $region48: #{_global_attention_impl.1} parent=1 // pred_region
      %293 = vsyncadd [#allocation13], 0
      %s295 = sshll.u32 [#allocation12], 4
      %s296 = int_to_ptr.vmem [resolvable:$true] %s295
      %s297 = sshll.u32 %s6, 4
      %s298 = int_to_ptr.hbm [resolvable:$true] %s297
      %300 = dma.vmem_to_hbm [thread:$0]  %s296, 32, %s298, [#allocation13]
    $region49: #{_global_attention_impl.1} parent=1 // pred_fallthru
      _
    // Predicated region
    $region50: #{_global_attention_impl.1} parent=1 // pred_check
      _
    $region51: #{_global_attention_impl.1} parent=1 // pred_check_branch
      %302 = sbr.rel (0) target = $region53
    $region52: #{_global_attention_impl.1} parent=1 // pred_region
      %304 = dma.done [#allocation4], 32
    $region53: #{_global_attention_impl.1} parent=1 // pred_fallthru
      _
    // Predicated region
    $region54: #{_global_attention_impl.1} parent=1 // pred_check
      _
    $region55: #{_global_attention_impl.1} parent=1 // pred_check_branch
      %306 = sbr.rel (0) target = $region57
    $region56: #{_global_attention_impl.1} parent=1 // pred_region
      %308 = dma.done [#allocation13], 32
    $region57: #{_global_attention_impl.1} parent=1 // pred_fallthru
      _
    %309 = vsyncpa [#allocation3], 1
    %310 = vsyncpa [#allocation6], 1
    %311 = vsyncpa [#allocation9], 1
    %312 = vsyncpa [#allocation4], 1
    %313 = vsyncpa [#allocation13], 1

</llo_original>
